<compile_context>
chip_gen: v6e
topology: v6e:2x2x1
jax: 0.10.0
libtpu: 0.0.40
codegen_flags: <defaults>
</compile_context>

<pallas_src>
import jax
import jax.numpy as jnp
from jax.experimental import pallas as pl
from jax.experimental.pallas import tpu as pltpu

EPS = 1e-5  # RMSNorm default eps in the reference module


def _round_up(x, m):
    return ((x + m - 1) // m) * m


def _norm_and_mix(res_f32, h_dtype, nw, w_tile, b_tile):
    """Shared body: RMSNorm (f32) of `res_f32` then Linear mixer against w_tile."""
    inv_d = 1.0 / res_f32.shape[-1]
    mean_sq = jnp.sum(res_f32 * res_f32, axis=-1, keepdims=True) * inv_d   # XLU reduce
    rstd = jax.lax.rsqrt(mean_sq + EPS)                                    # EUP
    normed = (res_f32 * rstd * nw).astype(h_dtype)                         # back to weight dtype

    # mixer (Linear stand-in): normed @ W^T with W in (out, in) layout; contract against
    # axis 1 of W so no transpose is ever materialized.  f32 accumulation on the MXU.
    out = jax.lax.dot_general(
        normed, w_tile,
        dimension_numbers=(((1,), (1,)), ((), ())),
        preferred_element_type=jnp.float32)
    return out + b_tile


def _block_kernel(h_ref, r_ref, nw_ref, w_ref, b_ref, hs_out_ref, res_out_ref):
    # h_ref        : (TR, D)  hidden dtype
    # r_ref        : (TR, D)  residual dtype (f32 from previous block, or same as hidden)
    # nw_ref       : (1, D)   f32 (cast hoisted to wrapper)
    # w_ref        : (TN, D)  weight tile, (out, in) layout, own dtype
    # b_ref        : (1, TN)  f32 bias tile
    # hs_out_ref   : (TR, TN) hidden dtype
    # res_out_ref  : (TR, D)  f32 (residual_in_fp32=True)
    res = h_ref[...].astype(jnp.float32) + r_ref[...].astype(jnp.float32)
    out = _norm_and_mix(res, h_ref.dtype, nw_ref[...], w_ref[...], b_ref[...])
    hs_out_ref[...] = out.astype(hs_out_ref.dtype)

    @pl.when(pl.program_id(1) == 0)                                  # write residual once
    def _():
        res_out_ref[...] = res


def _block_kernel_nores(h_ref, nw_ref, w_ref, b_ref, hs_out_ref, res_out_ref):
    # residual=None fast path: residual := hidden_states (no zeros tensor streamed).
    res = h_ref[...].astype(jnp.float32)
    out = _norm_and_mix(res, h_ref.dtype, nw_ref[...], w_ref[...], b_ref[...])
    hs_out_ref[...] = out.astype(hs_out_ref.dtype)

    @pl.when(pl.program_id(1) == 0)
    def _():
        res_out_ref[...] = res


def block_forward(hidden_states, residual, norm_weight, mixer_weight, mixer_bias,
                  *, row_tile=256, col_tile=None):
    """hidden_states, residual: [B, S, D]; returns (hidden_out [B,S,D], residual_out f32)."""
    B, S, D = hidden_states.shape
    R = B * S
    dt = hidden_states.dtype

    # Row tiling: big tiles (default 256) to fill the MXU and amortize grid overhead;
    # clamp for small problems, keep a multiple of 8 sublanes, pad rows if needed.
    rt = min(row_tile, _round_up(R, 8))
    rt = _round_up(rt, 8)
    R_pad = _round_up(R, rt)

    # Column (output-N) tiling of the weight.  Default: full D resident (fine for
    # moderate D / v6e's 128 MiB VMEM).  For large D on v7x pass col_tile (mult of 128).
    ct = D if col_tile is None else col_tile
    assert D % ct == 0, "col_tile must divide D"

    h2 = hidden_states.reshape(R, D)
    r2 = None if residual is None else residual.reshape(R, D)
    if R_pad != R:
        pad = ((0, R_pad - R), (0, 0))
        h2 = jnp.pad(h2, pad)
        if r2 is not None:
            r2 = jnp.pad(r2, pad)

    # Hoisted casts: done once here, not per grid step inside the kernel.
    nw = norm_weight.astype(jnp.float32).reshape(1, D)
    mb = mixer_bias.astype(jnp.float32).reshape(1, D)
    mw = mixer_weight  # (out, in) layout kept as-is; kernel contracts against axis 1.

    grid = (R_pad // rt, D // ct)

    h_spec = pl.BlockSpec((rt, D), lambda i, j: (i, 0))
    nw_spec = pl.BlockSpec((1, D), lambda i, j: (0, 0))
    w_spec = pl.BlockSpec((ct, D), lambda i, j: (j, 0))           # weight tile over out-dim
    b_spec = pl.BlockSpec((1, ct), lambda i, j: (0, j))
    hs_out_spec = pl.BlockSpec((rt, ct), lambda i, j: (i, j))
    res_out_spec = pl.BlockSpec((rt, D), lambda i, j: (i, 0))     # constant across j

    out_shape = (
        jax.ShapeDtypeStruct((R_pad, D), dt),
        jax.ShapeDtypeStruct((R_pad, D), jnp.float32),
    )
    compiler_params = pltpu.CompilerParams(
        dimension_semantics=("parallel", "arbitrary"),
        vmem_limit_bytes=64 * 1024 * 1024,
    )

    if r2 is None:
        hs_out, res_out = pl.pallas_call(
            _block_kernel_nores,
            grid=grid,
            in_specs=[h_spec, nw_spec, w_spec, b_spec],
            out_specs=[hs_out_spec, res_out_spec],
            out_shape=out_shape,
            compiler_params=compiler_params,
        )(h2, nw, mw, mb)
    else:
        r_spec = pl.BlockSpec((rt, D), lambda i, j: (i, 0))
        hs_out, res_out = pl.pallas_call(
            _block_kernel,
            grid=grid,
            in_specs=[h_spec, r_spec, nw_spec, w_spec, b_spec],
            out_specs=[hs_out_spec, res_out_spec],
            out_shape=out_shape,
            compiler_params=compiler_params,
        )(h2, r2, nw, mw, mb)

    if R_pad != R:
        hs_out = hs_out[:R]
        res_out = res_out[:R]
    return hs_out.reshape(B, S, D), res_out.reshape(B, S, D)


def block_reference(hidden_states, residual, norm_weight, mixer_weight, mixer_bias):
    """Pure-JAX reference mirroring the PyTorch Block forward (residual_in_fp32=True)."""
    res = hidden_states + residual if residual is not None else hidden_states
    x = res.astype(jnp.float32)
    rstd = 1.0 / jnp.sqrt(jnp.mean(jnp.square(x), axis=-1, keepdims=True) + EPS)
    normed = (x * rstd * norm_weight.astype(jnp.float32)).astype(hidden_states.dtype)
    out = normed @ mixer_weight.T + mixer_bias
    return out.astype(hidden_states.dtype), res.astype(jnp.float32)


if __name__ == "__main__":
    B, S, D = 2, 64, 256  # small but lane-dense (D multiple of 128); R = 128 rows

    key = jax.random.PRNGKey(0)
    k1, k2, k3, k4 = jax.random.split(key, 4)

    hidden_states = jax.random.normal(k1, (B, S, D), dtype=jnp.float32)
    residual = jax.random.normal(k2, (B, S, D), dtype=jnp.float32)

    # Deterministic parameter init (shapes from the module __init__):
    norm_weight = jnp.ones((D,), dtype=jnp.float32)                    # RMSNorm.weight
    mixer_weight = 0.02 * jax.random.normal(k3, (D, D), jnp.float32)   # Linear.weight (out,in)
    mixer_bias = 0.01 * jax.random.normal(k4, (D,), jnp.float32)       # Linear.bias

    # --- with residual ---
    hs_out, res_out = block_forward(hidden_states, residual,
                                    norm_weight, mixer_weight, mixer_bias)
    jax.block_until_ready((hs_out, res_out))
    hs_ref, res_ref = block_reference(hidden_states, residual,
                                      norm_weight, mixer_weight, mixer_bias)
    assert hs_out.shape == (B, S, D) and res_out.shape == (B, S, D)
    assert res_out.dtype == jnp.float32
    assert jnp.allclose(hs_out, hs_ref, atol=1e-4, rtol=1e-4)
    assert jnp.allclose(res_out, res_ref, atol=1e-5, rtol=1e-5)

    # --- residual=None fast path (first block) ---
    hs_out0, res_out0 = block_forward(hidden_states, None,
                                      norm_weight, mixer_weight, mixer_bias)
    jax.block_until_ready((hs_out0, res_out0))
    hs_ref0, res_ref0 = block_reference(hidden_states, None,
                                        norm_weight, mixer_weight, mixer_bias)
    assert jnp.allclose(hs_out0, hs_ref0, atol=1e-4, rtol=1e-4)
    assert jnp.allclose(res_out0, res_ref0, atol=1e-5, rtol=1e-5)

    print("KERNEL_OK")
</pallas_src>

<mosaic_0001>
module attributes {stable_mosaic.version = 11 : i64} {
  func.func @_block_kernel(%arg0: i32, %arg1: i32, %arg2: memref<128x256xf32, #tpu.memory_space<vmem>>, %arg3: memref<128x256xf32, #tpu.memory_space<vmem>>, %arg4: memref<1x256xf32, #tpu.memory_space<vmem>>, %arg5: memref<256x256xf32, #tpu.memory_space<vmem>>, %arg6: memref<1x256xf32, #tpu.memory_space<vmem>>, %arg7: memref<128x256xf32, #tpu.memory_space<vmem>>, %arg8: memref<128x256xf32, #tpu.memory_space<vmem>>) attributes {dimension_semantics = [#tpu.dimension_semantics<parallel>, #tpu.dimension_semantics<arbitrary>], iteration_bounds = array<i64: 1, 1>, scalar_prefetch = 0 : i64, scratch_operands = 0 : i64, tpu.core_type = #tpu.core_type<tc>, window_params = [{transform_indices = @transform_0, window_bounds = array<i64: 128, 256>}, {transform_indices = @transform_1, window_bounds = array<i64: 128, 256>}, {pipeline_mode = #tpu.pipeline_mode<synchronous>, transform_indices = @transform_2, window_bounds = array<i64: 1, 256>}, {transform_indices = @transform_3, window_bounds = array<i64: 256, 256>}, {transform_indices = @transform_4, window_bounds = array<i64: 1, 256>}, {transform_indices = @transform_5, window_bounds = array<i64: 128, 256>}, {transform_indices = @transform_6, window_bounds = array<i64: 128, 256>}]} {
    %c0 = arith.constant 0 : index
    %c0_0 = arith.constant 0 : index
    %0 = vector.load %arg2[%c0, %c0_0] : memref<128x256xf32, #tpu.memory_space<vmem>>, vector<128x256xf32>
    %c0_1 = arith.constant 0 : index
    %c0_2 = arith.constant 0 : index
    %1 = vector.load %arg3[%c0_1, %c0_2] : memref<128x256xf32, #tpu.memory_space<vmem>>, vector<128x256xf32>
    %2 = arith.addf %0, %1 : vector<128x256xf32>
    %c0_3 = arith.constant 0 : index
    %c0_4 = arith.constant 0 : index
    %3 = vector.load %arg4[%c0_3, %c0_4] : memref<1x256xf32, #tpu.memory_space<vmem>>, vector<1x256xf32>
    %c0_5 = arith.constant 0 : index
    %c0_6 = arith.constant 0 : index
    %4 = vector.load %arg5[%c0_5, %c0_6] : memref<256x256xf32, #tpu.memory_space<vmem>>, vector<256x256xf32>
    %c0_7 = arith.constant 0 : index
    %c0_8 = arith.constant 0 : index
    %5 = vector.load %arg6[%c0_7, %c0_8] : memref<1x256xf32, #tpu.memory_space<vmem>>, vector<1x256xf32>
    %6 = arith.mulf %2, %2 : vector<128x256xf32>
    %cst = arith.constant dense<0.000000e+00> : vector<128xf32>
    %7 = vector.multi_reduction <add>, %6, %cst [1] : vector<128x256xf32> to vector<128xf32>
    %8 = vector.shape_cast %7 : vector<128xf32> to vector<128x1xf32>
    %cst_9 = arith.constant 3.906250e-03 : f32
    %9 = vector.broadcast %cst_9 : f32 to vector<128x1xf32>
    %10 = arith.mulf %8, %9 : vector<128x1xf32>
    %cst_10 = arith.constant 9.99999974E-6 : f32
    %11 = vector.broadcast %cst_10 : f32 to vector<128x1xf32>
    %12 = arith.addf %10, %11 : vector<128x1xf32>
    %13 = math.rsqrt %12 : vector<128x1xf32>
    %14 = vector.broadcast %13 : vector<128x1xf32> to vector<128x256xf32>
    %15 = arith.mulf %2, %14 : vector<128x256xf32>
    %16 = vector.broadcast %3 : vector<1x256xf32> to vector<128x256xf32>
    %17 = arith.mulf %15, %16 : vector<128x256xf32>
    %cst_11 = arith.constant dense<0.000000e+00> : vector<128x256xf32>
    %18 = tpu.matmul %17, %4, %cst_11 {dimension_numbers = #tpu.dot_dimension_numbers<[1], [1], [0], [0], [0, 0, 1, 0], [], []>} : vector<128x256xf32>, vector<256x256xf32>, vector<128x256xf32> -> vector<128x256xf32>
    %19 = vector.broadcast %5 : vector<1x256xf32> to vector<128x256xf32>
    %20 = arith.addf %18, %19 : vector<128x256xf32>
    %c0_12 = arith.constant 0 : index
    %c0_13 = arith.constant 0 : index
    %21 = vector.load %arg7[%c0_12, %c0_13] : memref<128x256xf32, #tpu.memory_space<vmem>>, vector<128x256xf32>
    tpu.vector_store %arg7[%c0_12, %c0_13], %20 {strides = array<i32>} : memref<128x256xf32, #tpu.memory_space<vmem>>, vector<128x256xf32>,
    %c0_i32 = arith.constant 0 : i32
    %22 = arith.cmpi eq, %arg1, %c0_i32 : i32
    %23 = arith.extui %22 : i1 to i32
    %c0_i32_14 = arith.constant 0 : i32
    %24 = arith.cmpi ne, %23, %c0_i32_14 : i32
    scf.if %24 {
      %c0_15 = arith.constant 0 : index
      %c0_16 = arith.constant 0 : index
      %25 = vector.load %arg8[%c0_15, %c0_16] : memref<128x256xf32, #tpu.memory_space<vmem>>, vector<128x256xf32>
      tpu.vector_store %arg8[%c0_15, %c0_16], %2 {strides = array<i32>} : memref<128x256xf32, #tpu.memory_space<vmem>>, vector<128x256xf32>,
    } else {
    }
    return
  }
  func.func @transform_0(%arg0: i32, %arg1: i32) -> (i32, i32) {
    %c0_i32 = arith.constant 0 : i32
    %c0_i32_0 = arith.constant 0 : i32
    return %arg0, %c0_i32 : i32, i32
  }
  func.func @transform_1(%arg0: i32, %arg1: i32) -> (i32, i32) {
    %c0_i32 = arith.constant 0 : i32
    %c0_i32_0 = arith.constant 0 : i32
    return %arg0, %c0_i32 : i32, i32
  }
  func.func @transform_2(%arg0: i32, %arg1: i32) -> (i32, i32) {
    %c0_i32 = arith.constant 0 : i32
    %c0_i32_0 = arith.constant 0 : i32
    %c0_i32_1 = arith.constant 0 : i32
    return %c0_i32, %c0_i32_0 : i32, i32
  }
  func.func @transform_3(%arg0: i32, %arg1: i32) -> (i32, i32) {
    %c0_i32 = arith.constant 0 : i32
    %c0_i32_0 = arith.constant 0 : i32
    return %arg1, %c0_i32 : i32, i32
  }
  func.func @transform_4(%arg0: i32, %arg1: i32) -> (i32, i32) {
    %c0_i32 = arith.constant 0 : i32
    %c0_i32_0 = arith.constant 0 : i32
    return %c0_i32, %arg1 : i32, i32
  }
  func.func @transform_5(%arg0: i32, %arg1: i32) -> (i32, i32) {
    %c0_i32 = arith.constant 0 : i32
    return %arg0, %arg1 : i32, i32
  }
  func.func @transform_6(%arg0: i32, %arg1: i32) -> (i32, i32) {
    %c0_i32 = arith.constant 0 : i32
    %c0_i32_0 = arith.constant 0 : i32
    return %arg0, %c0_i32 : i32, i32
  }
}

</mosaic_0001>

<llo_original>
// kernel: tpu_custom_call.1
$region0: #{tpu_custom_call.1}
  #allocation0 [shape = 'u32[]', space=smem, size = 0x4, offset = 0x4, fixed_abs, tag = 'smem constant byte address 0x4 - core index']
  #allocation1 [shape = 'u32[144,128]{1,0:T(1,128)}', space=vmem, size = 0x12000, scoped, tag = 'internal scratch']
  %s0 = inlined_call_operand.hbm [shape: f32[128,256], index: 0, kind: input, shape index: {}]
  %s1 = inlined_call_operand.hbm [shape: f32[128,256], index: 1, kind: input, shape index: {}]
  %s2 = inlined_call_operand.vmem [shape: f32[1,256], index: 2, kind: input, shape index: {}]
  %s3 = inlined_call_operand.hbm [shape: f32[256,256], index: 3, kind: input, shape index: {}]
  %s4 = inlined_call_operand.vmem [shape: f32[1,256], index: 4, kind: input, shape index: {}]
  %s5 = inlined_call_operand.hbm [shape: f32[128,256], index: 5, kind: output, shape index: {0}]
  %s6 = inlined_call_operand.hbm [shape: f32[128,256], index: 6, kind: output, shape index: {1}]
  %7 = xla_tuple %s5, %s6
  %s8 = sld [smem:[#allocation0]]
  $region54: #{tpu_custom_call.1} parent=0
    _
  %s10 = ssub.s32 1, %s8
  %s11 = scalar_select 0, %s10, %s8
  $region1: #{tpu_custom_call.1} parent=0
    #allocation2 [shape = 'u8[131072]{0}', space=vmem, size = 0x20000, scoped, tag = 'input window, operand 0, single buffered']
    #allocation3 [shape = 's32[1]{0}', space=sflag, size = 0x4, scoped, tag = 'scoped memory for tpu_custom_call.1']
    #allocation4 [shape = 's32[1]{0}', space=sflag, size = 0x4, scoped, tag = 'scoped memory for tpu_custom_call.1']
    #allocation5 [shape = 'u8[131072]{0}', space=vmem, size = 0x20000, scoped, tag = 'input window, operand 1, single buffered']
    #allocation6 [shape = 's32[1]{0}', space=sflag, size = 0x4, scoped, tag = 'scoped memory for tpu_custom_call.1']
    #allocation7 [shape = 'u8[262144]{0}', space=vmem, size = 0x40000, scoped, tag = 'input window, operand 3, single buffered']
    #allocation8 [shape = 'u8[131072]{0}', space=vmem, size = 0x20000, scoped, tag = 'output window, operand 0, single buffered']
    #allocation9 [shape = 'u8[131072]{0}', space=vmem, size = 0x20000, scoped, tag = 'output window, operand 1, single buffered']
    #allocation10 [shape = 's32[1]{0}', space=sflag, size = 0x4, scoped, tag = 'scoped memory for tpu_custom_call.1']
    %12 = vsyncpa [#allocation3], 0
    %13 = vsyncpa [#allocation6], 0
    %14 = vsyncpa [#allocation4], 0
    %15 = vsyncpa [#allocation10], 0
    // Predicated region
    $region2: #{tpu_custom_call.1} parent=1 // pred_check
      _
    $region3: #{tpu_custom_call.1} parent=1 // pred_check_branch
      %17 = sbr.rel (0) target = $region5
    $region4: #{tpu_custom_call.1} parent=1 // pred_region
      %s19 = ssub.s32 4096, 4096
      %20 = vsyncadd [#allocation3], %s19
      %s21 = sshll.u32 [#allocation2], 4
      %s22 = int_to_ptr.vmem [resolvable:$true] %s21
      %27 = dma.hbm_to_vmem [thread:$0]  %s0, 4096, %s22, [#allocation3], 256, 256, 16
    $region5: #{tpu_custom_call.1} parent=1 // pred_fallthru
      _
    // Predicated region
    $region6: #{tpu_custom_call.1} parent=1 // pred_check
      _
    $region7: #{tpu_custom_call.1} parent=1 // pred_check_branch
      %29 = sbr.rel (0) target = $region9
    $region8: #{tpu_custom_call.1} parent=1 // pred_region
      %s31 = ssub.s32 4096, 4096
      %32 = vsyncadd [#allocation6], %s31
      %s33 = sshll.u32 [#allocation5], 4
      %s34 = int_to_ptr.vmem [resolvable:$true] %s33
      %39 = dma.hbm_to_vmem [thread:$0]  %s1, 4096, %s34, [#allocation6], 256, 256, 16
    $region9: #{tpu_custom_call.1} parent=1 // pred_fallthru
      _
    // Predicated region
    $region10: #{tpu_custom_call.1} parent=1 // pred_check
      _
    $region11: #{tpu_custom_call.1} parent=1 // pred_check_branch
      %41 = sbr.rel (0) target = $region13
    $region12: #{tpu_custom_call.1} parent=1 // pred_region
      _
    $region13: #{tpu_custom_call.1} parent=1 // pred_fallthru
      _
    // Predicated region
    $region14: #{tpu_custom_call.1} parent=1 // pred_check
      _
    $region15: #{tpu_custom_call.1} parent=1 // pred_check_branch
      %43 = sbr.rel (0) target = $region17
    $region16: #{tpu_custom_call.1} parent=1 // pred_region
      %s45 = ssub.s32 8192, 8192
      %46 = vsyncadd [#allocation6], %s45
      %s47 = sshll.u32 [#allocation7], 4
      %s48 = int_to_ptr.vmem [resolvable:$true] %s47
      %53 = dma.hbm_to_vmem [thread:$0]  %s3, 8192, %s48, [#allocation6], 256, 256, 16
    $region17: #{tpu_custom_call.1} parent=1 // pred_fallthru
      _
    // Predicated region
    $region18: #{tpu_custom_call.1} parent=1 // pred_check
      _
    $region19: #{tpu_custom_call.1} parent=1 // pred_check_branch
      %55 = sbr.rel (0) target = $region21
    $region20: #{tpu_custom_call.1} parent=1 // pred_region
      _
    $region21: #{tpu_custom_call.1} parent=1 // pred_fallthru
      _
    // Predicated region
    $region22: #{tpu_custom_call.1} parent=1 // pred_check
      _
    $region23: #{tpu_custom_call.1} parent=1 // pred_check_branch
      %57 = sbr.rel (0) target = $region25
    $region24: #{tpu_custom_call.1} parent=1 // pred_region
      %58 = dma.done [#allocation3], 4096
    $region25: #{tpu_custom_call.1} parent=1 // pred_fallthru
      _
    // Predicated region
    $region26: #{tpu_custom_call.1} parent=1 // pred_check
      _
    $region27: #{tpu_custom_call.1} parent=1 // pred_check_branch
      %60 = sbr.rel (0) target = $region29
    $region28: #{tpu_custom_call.1} parent=1 // pred_region
      %61 = dma.done [#allocation6], 4096
    $region29: #{tpu_custom_call.1} parent=1 // pred_fallthru
      _
    // Predicated region
    $region30: #{tpu_custom_call.1} parent=1 // pred_check
      _
    $region31: #{tpu_custom_call.1} parent=1 // pred_check_branch
      %63 = sbr.rel (0) target = $region33
    $region32: #{tpu_custom_call.1} parent=1 // pred_region
      %64 = dma.done [#allocation6], 8192
    $region33: #{tpu_custom_call.1} parent=1 // pred_fallthru
      _
    %v65 = vld [vmem:[#allocation2] sm:$0xff]
    %v66 = vld [vmem:[#allocation2 + $0x8] sm:$0xff]
    %v67 = vld [vmem:[#allocation2 + $0x10] sm:$0xff]
    %v68 = vld [vmem:[#allocation2 + $0x18] sm:$0xff]
    %v69 = vld [vmem:[#allocation2 + $0x20] sm:$0xff]
    %v70 = vld [vmem:[#allocation2 + $0x28] sm:$0xff]
    %v71 = vld [vmem:[#allocation2 + $0x30] sm:$0xff]
    %v72 = vld [vmem:[#allocation2 + $0x38] sm:$0xff]
    %v73 = vld [vmem:[#allocation2 + $0x40] sm:$0xff]
    %v74 = vld [vmem:[#allocation2 + $0x48] sm:$0xff]
    %v75 = vld [vmem:[#allocation2 + $0x50] sm:$0xff]
    %v76 = vld [vmem:[#allocation2 + $0x58] sm:$0xff]
    %v77 = vld [vmem:[#allocation2 + $0x60] sm:$0xff]
    %v78 = vld [vmem:[#allocation2 + $0x68] sm:$0xff]
    %v79 = vld [vmem:[#allocation2 + $0x70] sm:$0xff]
    %v80 = vld [vmem:[#allocation2 + $0x78] sm:$0xff]
    %v81 = vld [vmem:[#allocation2 + $0x80] sm:$0xff]
    %v82 = vld [vmem:[#allocation2 + $0x88] sm:$0xff]
    %v83 = vld [vmem:[#allocation2 + $0x90] sm:$0xff]
    %v84 = vld [vmem:[#allocation2 + $0x98] sm:$0xff]
    %v85 = vld [vmem:[#allocation2 + $0xa0] sm:$0xff]
    %v86 = vld [vmem:[#allocation2 + $0xa8] sm:$0xff]
    %v87 = vld [vmem:[#allocation2 + $0xb0] sm:$0xff]
    %v88 = vld [vmem:[#allocation2 + $0xb8] sm:$0xff]
    %v89 = vld [vmem:[#allocation2 + $0xc0] sm:$0xff]
    %v90 = vld [vmem:[#allocation2 + $0xc8] sm:$0xff]
    %v91 = vld [vmem:[#allocation2 + $0xd0] sm:$0xff]
    %v92 = vld [vmem:[#allocation2 + $0xd8] sm:$0xff]
    %v93 = vld [vmem:[#allocation2 + $0xe0] sm:$0xff]
    %v94 = vld [vmem:[#allocation2 + $0xe8] sm:$0xff]
    %v95 = vld [vmem:[#allocation2 + $0xf0] sm:$0xff]
    %v96 = vld [vmem:[#allocation2 + $0xf8] sm:$0xff]
    %v97 = vld [vmem:[#allocation5] sm:$0xff]
    %v98 = vld [vmem:[#allocation5 + $0x8] sm:$0xff]
    %v99 = vld [vmem:[#allocation5 + $0x10] sm:$0xff]
    %v100 = vld [vmem:[#allocation5 + $0x18] sm:$0xff]
    %v101 = vld [vmem:[#allocation5 + $0x20] sm:$0xff]
    %v102 = vld [vmem:[#allocation5 + $0x28] sm:$0xff]
    %v103 = vld [vmem:[#allocation5 + $0x30] sm:$0xff]
    %v104 = vld [vmem:[#allocation5 + $0x38] sm:$0xff]
    %v105 = vld [vmem:[#allocation5 + $0x40] sm:$0xff]
    %v106 = vld [vmem:[#allocation5 + $0x48] sm:$0xff]
    %v107 = vld [vmem:[#allocation5 + $0x50] sm:$0xff]
    %v108 = vld [vmem:[#allocation5 + $0x58] sm:$0xff]
    %v109 = vld [vmem:[#allocation5 + $0x60] sm:$0xff]
    %v110 = vld [vmem:[#allocation5 + $0x68] sm:$0xff]
    %v111 = vld [vmem:[#allocation5 + $0x70] sm:$0xff]
    %v112 = vld [vmem:[#allocation5 + $0x78] sm:$0xff]
    %v113 = vld [vmem:[#allocation5 + $0x80] sm:$0xff]
    %v114 = vld [vmem:[#allocation5 + $0x88] sm:$0xff]
    %v115 = vld [vmem:[#allocation5 + $0x90] sm:$0xff]
    %v116 = vld [vmem:[#allocation5 + $0x98] sm:$0xff]
    %v117 = vld [vmem:[#allocation5 + $0xa0] sm:$0xff]
    %v118 = vld [vmem:[#allocation5 + $0xa8] sm:$0xff]
    %v119 = vld [vmem:[#allocation5 + $0xb0] sm:$0xff]
    %v120 = vld [vmem:[#allocation5 + $0xb8] sm:$0xff]
    %v121 = vld [vmem:[#allocation5 + $0xc0] sm:$0xff]
    %v122 = vld [vmem:[#allocation5 + $0xc8] sm:$0xff]
    %v123 = vld [vmem:[#allocation5 + $0xd0] sm:$0xff]
    %v124 = vld [vmem:[#allocation5 + $0xd8] sm:$0xff]
    %v125 = vld [vmem:[#allocation5 + $0xe0] sm:$0xff]
    %v126 = vld [vmem:[#allocation5 + $0xe8] sm:$0xff]
    %v127 = vld [vmem:[#allocation5 + $0xf0] sm:$0xff]
    %v128 = vld [vmem:[#allocation5 + $0xf8] sm:$0xff]
    %v129 = vadd.f32 %v65, %v97
    %v130 = vadd.f32 %v66, %v98
    %v131 = vadd.f32 %v67, %v99
    %v132 = vadd.f32 %v68, %v100
    %v133 = vadd.f32 %v69, %v101
    %v134 = vadd.f32 %v70, %v102
    %v135 = vadd.f32 %v71, %v103
    %v136 = vadd.f32 %v72, %v104
    %v137 = vadd.f32 %v73, %v105
    %v138 = vadd.f32 %v74, %v106
    %v139 = vadd.f32 %v75, %v107
    %v140 = vadd.f32 %v76, %v108
    %v141 = vadd.f32 %v77, %v109
    %v142 = vadd.f32 %v78, %v110
    %v143 = vadd.f32 %v79, %v111
    %v144 = vadd.f32 %v80, %v112
    %v145 = vadd.f32 %v81, %v113
    %v146 = vadd.f32 %v82, %v114
    %v147 = vadd.f32 %v83, %v115
    %v148 = vadd.f32 %v84, %v116
    %v149 = vadd.f32 %v85, %v117
    %v150 = vadd.f32 %v86, %v118
    %v151 = vadd.f32 %v87, %v119
    %v152 = vadd.f32 %v88, %v120
    %v153 = vadd.f32 %v89, %v121
    %v154 = vadd.f32 %v90, %v122
    %v155 = vadd.f32 %v91, %v123
    %v156 = vadd.f32 %v92, %v124
    %v157 = vadd.f32 %v93, %v125
    %v158 = vadd.f32 %v94, %v126
    %v159 = vadd.f32 %v95, %v127
    %v160 = vadd.f32 %v96, %v128
    %v161 = vld [vmem:[%s2] sm:$0x3]
    %v162 = vld [vmem:[#allocation7] sm:$0xff]
    %v163 = vld [vmem:[#allocation7 + $0x8] sm:$0xff]
    %v164 = vld [vmem:[#allocation7 + $0x10] sm:$0xff]
    %v165 = vld [vmem:[#allocation7 + $0x18] sm:$0xff]
    %v166 = vld [vmem:[#allocation7 + $0x20] sm:$0xff]
    %v167 = vld [vmem:[#allocation7 + $0x28] sm:$0xff]
    %v168 = vld [vmem:[#allocation7 + $0x30] sm:$0xff]
    %v169 = vld [vmem:[#allocation7 + $0x38] sm:$0xff]
    %v170 = vld [vmem:[#allocation7 + $0x40] sm:$0xff]
    %v171 = vld [vmem:[#allocation7 + $0x48] sm:$0xff]
    %v172 = vld [vmem:[#allocation7 + $0x50] sm:$0xff]
    %v173 = vld [vmem:[#allocation7 + $0x58] sm:$0xff]
    %v174 = vld [vmem:[#allocation7 + $0x60] sm:$0xff]
    %v175 = vld [vmem:[#allocation7 + $0x68] sm:$0xff]
    %v176 = vld [vmem:[#allocation7 + $0x70] sm:$0xff]
    %v177 = vld [vmem:[#allocation7 + $0x78] sm:$0xff]
    %v178 = vld [vmem:[#allocation7 + $0x80] sm:$0xff]
    %v179 = vld [vmem:[#allocation7 + $0x88] sm:$0xff]
    %v180 = vld [vmem:[#allocation7 + $0x90] sm:$0xff]
    %v181 = vld [vmem:[#allocation7 + $0x98] sm:$0xff]
    %v182 = vld [vmem:[#allocation7 + $0xa0] sm:$0xff]
    %v183 = vld [vmem:[#allocation7 + $0xa8] sm:$0xff]
    %v184 = vld [vmem:[#allocation7 + $0xb0] sm:$0xff]
    %v185 = vld [vmem:[#allocation7 + $0xb8] sm:$0xff]
    %v186 = vld [vmem:[#allocation7 + $0xc0] sm:$0xff]
    %v187 = vld [vmem:[#allocation7 + $0xc8] sm:$0xff]
    %v188 = vld [vmem:[#allocation7 + $0xd0] sm:$0xff]
    %v189 = vld [vmem:[#allocation7 + $0xd8] sm:$0xff]
    %v190 = vld [vmem:[#allocation7 + $0xe0] sm:$0xff]
    %v191 = vld [vmem:[#allocation7 + $0xe8] sm:$0xff]
    %v192 = vld [vmem:[#allocation7 + $0xf0] sm:$0xff]
    %v193 = vld [vmem:[#allocation7 + $0xf8] sm:$0xff]
    %v194 = vld [vmem:[#allocation7 + $0x100] sm:$0xff]
    %v195 = vld [vmem:[#allocation7 + $0x108] sm:$0xff]
    %v196 = vld [vmem:[#allocation7 + $0x110] sm:$0xff]
    %v197 = vld [vmem:[#allocation7 + $0x118] sm:$0xff]
    %v198 = vld [vmem:[#allocation7 + $0x120] sm:$0xff]
    %v199 = vld [vmem:[#allocation7 + $0x128] sm:$0xff]
    %v200 = vld [vmem:[#allocation7 + $0x130] sm:$0xff]
    %v201 = vld [vmem:[#allocation7 + $0x138] sm:$0xff]
    %v202 = vld [vmem:[#allocation7 + $0x140] sm:$0xff]
    %v203 = vld [vmem:[#allocation7 + $0x148] sm:$0xff]
    %v204 = vld [vmem:[#allocation7 + $0x150] sm:$0xff]
    %v205 = vld [vmem:[#allocation7 + $0x158] sm:$0xff]
    %v206 = vld [vmem:[#allocation7 + $0x160] sm:$0xff]
    %v207 = vld [vmem:[#allocation7 + $0x168] sm:$0xff]
    %v208 = vld [vmem:[#allocation7 + $0x170] sm:$0xff]
    %v209 = vld [vmem:[#allocation7 + $0x178] sm:$0xff]
    %v210 = vld [vmem:[#allocation7 + $0x180] sm:$0xff]
    %v211 = vld [vmem:[#allocation7 + $0x188] sm:$0xff]
    %v212 = vld [vmem:[#allocation7 + $0x190] sm:$0xff]
    %v213 = vld [vmem:[#allocation7 + $0x198] sm:$0xff]
    %v214 = vld [vmem:[#allocation7 + $0x1a0] sm:$0xff]
    %v215 = vld [vmem:[#allocation7 + $0x1a8] sm:$0xff]
    %v216 = vld [vmem:[#allocation7 + $0x1b0] sm:$0xff]
    %v217 = vld [vmem:[#allocation7 + $0x1b8] sm:$0xff]
    %v218 = vld [vmem:[#allocation7 + $0x1c0] sm:$0xff]
    %v219 = vld [vmem:[#allocation7 + $0x1c8] sm:$0xff]
    %v220 = vld [vmem:[#allocation7 + $0x1d0] sm:$0xff]
    %v221 = vld [vmem:[#allocation7 + $0x1d8] sm:$0xff]
    %v222 = vld [vmem:[#allocation7 + $0x1e0] sm:$0xff]
    %v223 = vld [vmem:[#allocation7 + $0x1e8] sm:$0xff]
    %v224 = vld [vmem:[#allocation7 + $0x1f0] sm:$0xff]
    %v225 = vld [vmem:[#allocation7 + $0x1f8] sm:$0xff]
    %v226 = vld [vmem:[%s4] sm:$0x3]
    %v227 = vmul.f32 %v129, %v129
    %v228 = vmul.f32 %v130, %v130
    %v229 = vmul.f32 %v131, %v131
    %v230 = vmul.f32 %v132, %v132
    %v231 = vmul.f32 %v133, %v133
    %v232 = vmul.f32 %v134, %v134
    %v233 = vmul.f32 %v135, %v135
    %v234 = vmul.f32 %v136, %v136
    %v235 = vmul.f32 %v137, %v137
    %v236 = vmul.f32 %v138, %v138
    %v237 = vmul.f32 %v139, %v139
    %v238 = vmul.f32 %v140, %v140
    %v239 = vmul.f32 %v141, %v141
    %v240 = vmul.f32 %v142, %v142
    %v241 = vmul.f32 %v143, %v143
    %v242 = vmul.f32 %v144, %v144
    %v243 = vmul.f32 %v145, %v145
    %v244 = vmul.f32 %v146, %v146
    %v245 = vmul.f32 %v147, %v147
    %v246 = vmul.f32 %v148, %v148
    %v247 = vmul.f32 %v149, %v149
    %v248 = vmul.f32 %v150, %v150
    %v249 = vmul.f32 %v151, %v151
    %v250 = vmul.f32 %v152, %v152
    %v251 = vmul.f32 %v153, %v153
    %v252 = vmul.f32 %v154, %v154
    %v253 = vmul.f32 %v155, %v155
    %v254 = vmul.f32 %v156, %v156
    %v255 = vmul.f32 %v157, %v157
    %v256 = vmul.f32 %v158, %v158
    %v257 = vmul.f32 %v159, %v159
    %v258 = vmul.f32 %v160, %v160
    %v259 = vadd.f32 %v227, %v228
    %260 = vadd.xlane.f32.xlu0 %v259
    %v261 = vpop.xlane.xlu0 %260
    %v262 = vadd.f32 %v229, %v230
    %263 = vadd.xlane.f32.xlu0 %v262
    %v264 = vpop.xlane.xlu0 %263
    %v265 = vadd.f32 %v231, %v232
    %266 = vadd.xlane.f32.xlu0 %v265
    %v267 = vpop.xlane.xlu0 %266
    %v268 = vadd.f32 %v233, %v234
    %269 = vadd.xlane.f32.xlu0 %v268
    %v270 = vpop.xlane.xlu0 %269
    %v271 = vadd.f32 %v235, %v236
    %272 = vadd.xlane.f32.xlu0 %v271
    %v273 = vpop.xlane.xlu0 %272
    %v274 = vadd.f32 %v237, %v238
    %275 = vadd.xlane.f32.xlu0 %v274
    %v276 = vpop.xlane.xlu0 %275
    %v277 = vadd.f32 %v239, %v240
    %278 = vadd.xlane.f32.xlu0 %v277
    %v279 = vpop.xlane.xlu0 %278
    %v280 = vadd.f32 %v241, %v242
    %281 = vadd.xlane.f32.xlu0 %v280
    %v282 = vpop.xlane.xlu0 %281
    %v283 = vadd.f32 %v243, %v244
    %284 = vadd.xlane.f32.xlu0 %v283
    %v285 = vpop.xlane.xlu0 %284
    %v286 = vadd.f32 %v245, %v246
    %287 = vadd.xlane.f32.xlu0 %v286
    %v288 = vpop.xlane.xlu0 %287
    %v289 = vadd.f32 %v247, %v248
    %290 = vadd.xlane.f32.xlu0 %v289
    %v291 = vpop.xlane.xlu0 %290
    %v292 = vadd.f32 %v249, %v250
    %293 = vadd.xlane.f32.xlu0 %v292
    %v294 = vpop.xlane.xlu0 %293
    %v295 = vadd.f32 %v251, %v252
    %296 = vadd.xlane.f32.xlu0 %v295
    %v297 = vpop.xlane.xlu0 %296
    %v298 = vadd.f32 %v253, %v254
    %299 = vadd.xlane.f32.xlu0 %v298
    %v300 = vpop.xlane.xlu0 %299
    %v301 = vadd.f32 %v255, %v256
    %302 = vadd.xlane.f32.xlu0 %v301
    %v303 = vpop.xlane.xlu0 %302
    %v304 = vadd.f32 %v257, %v258
    %305 = vadd.xlane.f32.xlu0 %v304
    %v306 = vpop.xlane.xlu0 %305
    %v307 = vmul.f32 %v261, 0.00390625
    %v308 = vmul.f32 %v264, 0.00390625
    %v309 = vmul.f32 %v267, 0.00390625
    %v310 = vmul.f32 %v270, 0.00390625
    %v311 = vmul.f32 %v273, 0.00390625
    %v312 = vmul.f32 %v276, 0.00390625
    %v313 = vmul.f32 %v279, 0.00390625
    %v314 = vmul.f32 %v282, 0.00390625
    %v315 = vmul.f32 %v285, 0.00390625
    %v316 = vmul.f32 %v288, 0.00390625
    %v317 = vmul.f32 %v291, 0.00390625
    %v318 = vmul.f32 %v294, 0.00390625
    %v319 = vmul.f32 %v297, 0.00390625
    %v320 = vmul.f32 %v300, 0.00390625
    %v321 = vmul.f32 %v303, 0.00390625
    %v322 = vmul.f32 %v306, 0.00390625
    %v323 = vadd.f32 %v307, 1e-05
    %v324 = vadd.f32 %v308, 1e-05
    %v325 = vadd.f32 %v309, 1e-05
    %v326 = vadd.f32 %v310, 1e-05
    %v327 = vadd.f32 %v311, 1e-05
    %v328 = vadd.f32 %v312, 1e-05
    %v329 = vadd.f32 %v313, 1e-05
    %v330 = vadd.f32 %v314, 1e-05
    %v331 = vadd.f32 %v315, 1e-05
    %v332 = vadd.f32 %v316, 1e-05
    %v333 = vadd.f32 %v317, 1e-05
    %v334 = vadd.f32 %v318, 1e-05
    %v335 = vadd.f32 %v319, 1e-05
    %v336 = vadd.f32 %v320, 1e-05
    %v337 = vadd.f32 %v321, 1e-05
    %v338 = vadd.f32 %v322, 1e-05
    %v339 = vrsqrt.pop %v323
    %v340 = vrsqrt.pop %v324
    %v341 = vrsqrt.pop %v325
    %v342 = vrsqrt.pop %v326
    %v343 = vrsqrt.pop %v327
    %v344 = vrsqrt.pop %v328
    %v345 = vrsqrt.pop %v329
    %v346 = vrsqrt.pop %v330
    %v347 = vrsqrt.pop %v331
    %v348 = vrsqrt.pop %v332
    %v349 = vrsqrt.pop %v333
    %v350 = vrsqrt.pop %v334
    %v351 = vrsqrt.pop %v335
    %v352 = vrsqrt.pop %v336
    %v353 = vrsqrt.pop %v337
    %v354 = vrsqrt.pop %v338
    %v355 = vmul.f32 %v129, %v339
    %v356 = vmul.f32 %v130, %v339
    %v357 = vmul.f32 %v131, %v340
    %v358 = vmul.f32 %v132, %v340
    %v359 = vmul.f32 %v133, %v341
    %v360 = vmul.f32 %v134, %v341
    %v361 = vmul.f32 %v135, %v342
    %v362 = vmul.f32 %v136, %v342
    %v363 = vmul.f32 %v137, %v343
    %v364 = vmul.f32 %v138, %v343
    %v365 = vmul.f32 %v139, %v344
    %v366 = vmul.f32 %v140, %v344
    %v367 = vmul.f32 %v141, %v345
    %v368 = vmul.f32 %v142, %v345
    %v369 = vmul.f32 %v143, %v346
    %v370 = vmul.f32 %v144, %v346
    %v371 = vmul.f32 %v145, %v347
    %v372 = vmul.f32 %v146, %v347
    %v373 = vmul.f32 %v147, %v348
    %v374 = vmul.f32 %v148, %v348
    %v375 = vmul.f32 %v149, %v349
    %v376 = vmul.f32 %v150, %v349
    %v377 = vmul.f32 %v151, %v350
    %v378 = vmul.f32 %v152, %v350
    %v379 = vmul.f32 %v153, %v351
    %v380 = vmul.f32 %v154, %v351
    %v381 = vmul.f32 %v155, %v352
    %v382 = vmul.f32 %v156, %v352
    %v383 = vmul.f32 %v157, %v353
    %v384 = vmul.f32 %v158, %v353
    %v385 = vmul.f32 %v159, %v354
    %v386 = vmul.f32 %v160, %v354
    %v388 = vlaneseq
    %v389 = vshrl.u32 %v388, 7
    %v390 = vsub.s32 0, %v389
    %v391 = vrot.slane %v161, %v390
    %v392 = vlaneseq
    %v393 = vshrl.u32 %v392, 7
    %v394 = vsub.s32 1, %v393
    %v395 = vrot.slane %v161, %v394
    %v398 = vmul.f32 %v355, %v391
    %v399 = vmul.f32 %v356, %v395
    %v400 = vmul.f32 %v357, %v391
    %v401 = vmul.f32 %v358, %v395
    %v402 = vmul.f32 %v359, %v391
    %v403 = vmul.f32 %v360, %v395
    %v404 = vmul.f32 %v361, %v391
    %v405 = vmul.f32 %v362, %v395
    %v406 = vmul.f32 %v363, %v391
    %v407 = vmul.f32 %v364, %v395
    %v408 = vmul.f32 %v365, %v391
    %v409 = vmul.f32 %v366, %v395
    %v410 = vmul.f32 %v367, %v391
    %v411 = vmul.f32 %v368, %v395
    %v412 = vmul.f32 %v369, %v391
    %v413 = vmul.f32 %v370, %v395
    %v414 = vmul.f32 %v371, %v391
    %v415 = vmul.f32 %v372, %v395
    %v416 = vmul.f32 %v373, %v391
    %v417 = vmul.f32 %v374, %v395
    %v418 = vmul.f32 %v375, %v391
    %v419 = vmul.f32 %v376, %v395
    %v420 = vmul.f32 %v377, %v391
    %v421 = vmul.f32 %v378, %v395
    %v422 = vmul.f32 %v379, %v391
    %v423 = vmul.f32 %v380, %v395
    %v424 = vmul.f32 %v381, %v391
    %v425 = vmul.f32 %v382, %v395
    %v426 = vmul.f32 %v383, %v391
    %v427 = vmul.f32 %v384, %v395
    %v428 = vmul.f32 %v385, %v391
    %v429 = vmul.f32 %v386, %v395
    %v431 = vlaneseq
    %v432 = vshrl.u32 %v431, 7
    %v433 = vsub.s32 0, %v432
    %v434 = vrot.slane %v226, %v433
    %v435 = vlaneseq
    %v436 = vshrl.u32 %v435, 7
    %v437 = vsub.s32 1, %v436
    %v438 = vrot.slane %v226, %v437
    %441 = vmatprep.subr.mxu0 %v193
    %442 = vmatpush1.xpose.msra.mxu0 %v192
    %443 = vmatprep.subr.mxu0 %v191
    %444 = vmatpush1.xpose.msra.mxu0 %v190
    %445 = vmatprep.subr.mxu0 %v189
    %446 = vmatpush1.xpose.msra.mxu0 %v188
    %447 = vmatprep.subr.mxu0 %v187
    %448 = vmatpush1.xpose.msra.mxu0 %v186
    %449 = vmatprep.subr.mxu0 %v185
    %450 = vmatpush1.xpose.msra.mxu0 %v184
    %451 = vmatprep.subr.mxu0 %v183
    %452 = vmatpush1.xpose.msra.mxu0 %v182
    %453 = vmatprep.subr.mxu0 %v181
    %454 = vmatpush1.xpose.msra.mxu0 %v180
    %455 = vmatprep.subr.mxu0 %v179
    %456 = vmatpush1.xpose.msra.mxu0 %v178
    %457 = vmatprep.subr.mxu0 %v177
    %458 = vmatpush1.xpose.msra.mxu0 %v176
    %459 = vmatprep.subr.mxu0 %v175
    %460 = vmatpush1.xpose.msra.mxu0 %v174
    %461 = vmatprep.subr.mxu0 %v173
    %462 = vmatpush1.xpose.msra.mxu0 %v172
    %463 = vmatprep.subr.mxu0 %v171
    %464 = vmatpush1.xpose.msra.mxu0 %v170
    %465 = vmatprep.subr.mxu0 %v169
    %466 = vmatpush1.xpose.msra.mxu0 %v168
    %467 = vmatprep.subr.mxu0 %v167
    %468 = vmatpush1.xpose.msra.mxu0 %v166
    %469 = vmatprep.subr.mxu0 %v165
    %470 = vmatpush1.xpose.msra.mxu0 %v164
    %471 = vmatprep.subr.mxu0 %v163
    %472 = vmatpush1.xpose.msra.mxu0 %v162
    %473 = vmatprep.subr.mxu0 %v225
    %474 = vmatpush2.xpose.msra.mxu0 %v224
    %475 = vmatprep.subr.mxu0 %v223
    %476 = vmatpush2.xpose.msra.mxu0 %v222
    %477 = vmatprep.subr.mxu0 %v221
    %478 = vmatpush2.xpose.msra.mxu0 %v220
    %479 = vmatprep.subr.mxu0 %v219
    %480 = vmatpush2.xpose.msra.mxu0 %v218
    %481 = vmatprep.subr.mxu0 %v217
    %482 = vmatpush2.xpose.msra.mxu0 %v216
    %483 = vmatprep.subr.mxu0 %v215
    %484 = vmatpush2.xpose.msra.mxu0 %v214
    %485 = vmatprep.subr.mxu0 %v213
    %486 = vmatpush2.xpose.msra.mxu0 %v212
    %487 = vmatprep.subr.mxu0 %v211
    %488 = vmatpush2.xpose.msra.mxu0 %v210
    %489 = vmatprep.subr.mxu0 %v209
    %490 = vmatpush2.xpose.msra.mxu0 %v208
    %491 = vmatprep.subr.mxu0 %v207
    %492 = vmatpush2.xpose.msra.mxu0 %v206
    %493 = vmatprep.subr.mxu0 %v205
    %494 = vmatpush2.xpose.msra.mxu0 %v204
    %495 = vmatprep.subr.mxu0 %v203
    %496 = vmatpush2.xpose.msra.mxu0 %v202
    %497 = vmatprep.subr.mxu0 %v201
    %498 = vmatpush2.xpose.msra.mxu0 %v200
    %499 = vmatprep.subr.mxu0 %v199
    %500 = vmatpush2.xpose.msra.mxu0 %v198
    %501 = vmatprep.subr.mxu0 %v197
    %502 = vmatpush2.xpose.msra.mxu0 %v196
    %503 = vmatprep.subr.mxu0 %v195
    %504 = vmatpush2.xpose.msra.mxu0 %v194
    %505 = vmatprep.mubr.f32.mxu0 %v399
    %506 = vmatmul.mubr.f32.gmra.mxu0 %v398
    %v507 = vpop.f32.mrf.mxu0
    %v508 = vadd.f32 %v434, %v507
    %v509 = vpop.f32.mrf.mxu0
    %v510 = vadd.f32 %v438, %v509
    %511 = vmatprep.mubr.f32.mxu0 %v401
    %512 = vmatmul.mubr.f32.gmra.mxu0 %v400
    %v513 = vpop.f32.mrf.mxu0
    %v514 = vadd.f32 %v434, %v513
    %v515 = vpop.f32.mrf.mxu0
    %v516 = vadd.f32 %v438, %v515
    %517 = vmatprep.mubr.f32.mxu0 %v403
    %518 = vmatmul.mubr.f32.gmra.mxu0 %v402
    %v519 = vpop.f32.mrf.mxu0
    %v520 = vadd.f32 %v434, %v519
    %v521 = vpop.f32.mrf.mxu0
    %v522 = vadd.f32 %v438, %v521
    %523 = vmatprep.mubr.f32.mxu0 %v405
    %524 = vmatmul.mubr.f32.gmra.mxu0 %v404
    %v525 = vpop.f32.mrf.mxu0
    %v526 = vadd.f32 %v434, %v525
    %v527 = vpop.f32.mrf.mxu0
    %v528 = vadd.f32 %v438, %v527
    %529 = vmatprep.mubr.f32.mxu0 %v407
    %530 = vmatmul.mubr.f32.gmra.mxu0 %v406
    %v531 = vpop.f32.mrf.mxu0
    %v532 = vadd.f32 %v434, %v531
    %v533 = vpop.f32.mrf.mxu0
    %v534 = vadd.f32 %v438, %v533
    %535 = vmatprep.mubr.f32.mxu0 %v409
    %536 = vmatmul.mubr.f32.gmra.mxu0 %v408
    %v537 = vpop.f32.mrf.mxu0
    %v538 = vadd.f32 %v434, %v537
    %v539 = vpop.f32.mrf.mxu0
    %v540 = vadd.f32 %v438, %v539
    %541 = vmatprep.mubr.f32.mxu0 %v411
    %542 = vmatmul.mubr.f32.gmra.mxu0 %v410
    %v543 = vpop.f32.mrf.mxu0
    %v544 = vadd.f32 %v434, %v543
    %v545 = vpop.f32.mrf.mxu0
    %v546 = vadd.f32 %v438, %v545
    %547 = vmatprep.mubr.f32.mxu0 %v413
    %548 = vmatmul.mubr.f32.gmra.mxu0 %v412
    %v549 = vpop.f32.mrf.mxu0
    %v550 = vadd.f32 %v434, %v549
    %v551 = vpop.f32.mrf.mxu0
    %v552 = vadd.f32 %v438, %v551
    %553 = vmatprep.mubr.f32.mxu0 %v415
    %554 = vmatmul.mubr.f32.gmra.mxu0 %v414
    %v555 = vpop.f32.mrf.mxu0
    %v556 = vadd.f32 %v434, %v555
    %v557 = vpop.f32.mrf.mxu0
    %v558 = vadd.f32 %v438, %v557
    %559 = vmatprep.mubr.f32.mxu0 %v417
    %560 = vmatmul.mubr.f32.gmra.mxu0 %v416
    %v561 = vpop.f32.mrf.mxu0
    %v562 = vadd.f32 %v434, %v561
    %v563 = vpop.f32.mrf.mxu0
    %v564 = vadd.f32 %v438, %v563
    %565 = vmatprep.mubr.f32.mxu0 %v419
    %566 = vmatmul.mubr.f32.gmra.mxu0 %v418
    %v567 = vpop.f32.mrf.mxu0
    %v568 = vadd.f32 %v434, %v567
    %v569 = vpop.f32.mrf.mxu0
    %v570 = vadd.f32 %v438, %v569
    %571 = vmatprep.mubr.f32.mxu0 %v421
    %572 = vmatmul.mubr.f32.gmra.mxu0 %v420
    %v573 = vpop.f32.mrf.mxu0
    %v574 = vadd.f32 %v434, %v573
    %v575 = vpop.f32.mrf.mxu0
    %v576 = vadd.f32 %v438, %v575
    %577 = vmatprep.mubr.f32.mxu0 %v423
    %578 = vmatmul.mubr.f32.gmra.mxu0 %v422
    %v579 = vpop.f32.mrf.mxu0
    %v580 = vadd.f32 %v434, %v579
    %v581 = vpop.f32.mrf.mxu0
    %v582 = vadd.f32 %v438, %v581
    %583 = vmatprep.mubr.f32.mxu0 %v425
    %584 = vmatmul.mubr.f32.gmra.mxu0 %v424
    %v585 = vpop.f32.mrf.mxu0
    %v586 = vadd.f32 %v434, %v585
    %v587 = vpop.f32.mrf.mxu0
    %v588 = vadd.f32 %v438, %v587
    %589 = vmatprep.mubr.f32.mxu0 %v427
    %590 = vmatmul.mubr.f32.gmra.mxu0 %v426
    %v591 = vpop.f32.mrf.mxu0
    %v592 = vadd.f32 %v434, %v591
    %v593 = vpop.f32.mrf.mxu0
    %v594 = vadd.f32 %v438, %v593
    %595 = vmatprep.mubr.f32.mxu0 %v429
    %596 = vmatmul.mubr.f32.gmra.mxu0 %v428
    %v597 = vpop.f32.mrf.mxu0
    %v598 = vadd.f32 %v434, %v597
    %v599 = vpop.f32.mrf.mxu0
    %v600 = vadd.f32 %v438, %v599
    %601 = vdwg.mxu0
    %602 = vst [vmem:[#allocation8] sm:$0xff] %v508
    %603 = vst [vmem:[#allocation8 + $0x8] sm:$0xff] %v510
    %604 = vst [vmem:[#allocation8 + $0x10] sm:$0xff] %v514
    %605 = vst [vmem:[#allocation8 + $0x18] sm:$0xff] %v516
    %606 = vst [vmem:[#allocation8 + $0x20] sm:$0xff] %v520
    %607 = vst [vmem:[#allocation8 + $0x28] sm:$0xff] %v522
    %608 = vst [vmem:[#allocation8 + $0x30] sm:$0xff] %v526
    %609 = vst [vmem:[#allocation8 + $0x38] sm:$0xff] %v528
    %610 = vst [vmem:[#allocation8 + $0x40] sm:$0xff] %v532
    %611 = vst [vmem:[#allocation8 + $0x48] sm:$0xff] %v534
    %612 = vst [vmem:[#allocation8 + $0x50] sm:$0xff] %v538
    %613 = vst [vmem:[#allocation8 + $0x58] sm:$0xff] %v540
    %614 = vst [vmem:[#allocation8 + $0x60] sm:$0xff] %v544
    %615 = vst [vmem:[#allocation8 + $0x68] sm:$0xff] %v546
    %616 = vst [vmem:[#allocation8 + $0x70] sm:$0xff] %v550
    %617 = vst [vmem:[#allocation8 + $0x78] sm:$0xff] %v552
    %618 = vst [vmem:[#allocation8 + $0x80] sm:$0xff] %v556
    %619 = vst [vmem:[#allocation8 + $0x88] sm:$0xff] %v558
    %620 = vst [vmem:[#allocation8 + $0x90] sm:$0xff] %v562
    %621 = vst [vmem:[#allocation8 + $0x98] sm:$0xff] %v564
    %622 = vst [vmem:[#allocation8 + $0xa0] sm:$0xff] %v568
    %623 = vst [vmem:[#allocation8 + $0xa8] sm:$0xff] %v570
    %624 = vst [vmem:[#allocation8 + $0xb0] sm:$0xff] %v574
    %625 = vst [vmem:[#allocation8 + $0xb8] sm:$0xff] %v576
    %626 = vst [vmem:[#allocation8 + $0xc0] sm:$0xff] %v580
    %627 = vst [vmem:[#allocation8 + $0xc8] sm:$0xff] %v582
    %628 = vst [vmem:[#allocation8 + $0xd0] sm:$0xff] %v586
    %629 = vst [vmem:[#allocation8 + $0xd8] sm:$0xff] %v588
    %630 = vst [vmem:[#allocation8 + $0xe0] sm:$0xff] %v592
    %631 = vst [vmem:[#allocation8 + $0xe8] sm:$0xff] %v594
    %632 = vst [vmem:[#allocation8 + $0xf0] sm:$0xff] %v598
    %633 = vst [vmem:[#allocation8 + $0xf8] sm:$0xff] %v600
    %p634 = scmp.eq.s32.totalorder 0, 0
    // Predicated region
    $region34: #{tpu_custom_call.1} parent=1 // pred_check
      %p635 = pneg %p634
    $region35: #{tpu_custom_call.1} parent=1 // pred_check_branch
      %637 = sbr.rel (%p635) target = $region37
    $region36: #{tpu_custom_call.1} parent=1 // pred_region
      %638 = vst [vmem:[#allocation9] sm:$0xff] %v129
      %639 = vst [vmem:[#allocation9 + $0x8] sm:$0xff] %v130
      %640 = vst [vmem:[#allocation9 + $0x10] sm:$0xff] %v131
      %641 = vst [vmem:[#allocation9 + $0x18] sm:$0xff] %v132
      %642 = vst [vmem:[#allocation9 + $0x20] sm:$0xff] %v133
      %643 = vst [vmem:[#allocation9 + $0x28] sm:$0xff] %v134
      %644 = vst [vmem:[#allocation9 + $0x30] sm:$0xff] %v135
      %645 = vst [vmem:[#allocation9 + $0x38] sm:$0xff] %v136
      %646 = vst [vmem:[#allocation9 + $0x40] sm:$0xff] %v137
      %647 = vst [vmem:[#allocation9 + $0x48] sm:$0xff] %v138
      %648 = vst [vmem:[#allocation9 + $0x50] sm:$0xff] %v139
      %649 = vst [vmem:[#allocation9 + $0x58] sm:$0xff] %v140
      %650 = vst [vmem:[#allocation9 + $0x60] sm:$0xff] %v141
      %651 = vst [vmem:[#allocation9 + $0x68] sm:$0xff] %v142
      %652 = vst [vmem:[#allocation9 + $0x70] sm:$0xff] %v143
      %653 = vst [vmem:[#allocation9 + $0x78] sm:$0xff] %v144
      %654 = vst [vmem:[#allocation9 + $0x80] sm:$0xff] %v145
      %655 = vst [vmem:[#allocation9 + $0x88] sm:$0xff] %v146
      %656 = vst [vmem:[#allocation9 + $0x90] sm:$0xff] %v147
      %657 = vst [vmem:[#allocation9 + $0x98] sm:$0xff] %v148
      %658 = vst [vmem:[#allocation9 + $0xa0] sm:$0xff] %v149
      %659 = vst [vmem:[#allocation9 + $0xa8] sm:$0xff] %v150
      %660 = vst [vmem:[#allocation9 + $0xb0] sm:$0xff] %v151
      %661 = vst [vmem:[#allocation9 + $0xb8] sm:$0xff] %v152
      %662 = vst [vmem:[#allocation9 + $0xc0] sm:$0xff] %v153
      %663 = vst [vmem:[#allocation9 + $0xc8] sm:$0xff] %v154
      %664 = vst [vmem:[#allocation9 + $0xd0] sm:$0xff] %v155
      %665 = vst [vmem:[#allocation9 + $0xd8] sm:$0xff] %v156
      %666 = vst [vmem:[#allocation9 + $0xe0] sm:$0xff] %v157
      %667 = vst [vmem:[#allocation9 + $0xe8] sm:$0xff] %v158
      %668 = vst [vmem:[#allocation9 + $0xf0] sm:$0xff] %v159
      %669 = vst [vmem:[#allocation9 + $0xf8] sm:$0xff] %v160
    $region37: #{tpu_custom_call.1} parent=1 // pred_fallthru
      _
    // Predicated region
    $region38: #{tpu_custom_call.1} parent=1 // pred_check
      _
    $region39: #{tpu_custom_call.1} parent=1 // pred_check_branch
      %671 = sbr.rel (0) target = $region41
    $region40: #{tpu_custom_call.1} parent=1 // pred_region
      %s673 = ssub.s32 4096, 4096
      %674 = vsyncadd [#allocation4], %s673
      %s675 = sshll.u32 [#allocation8], 4
      %s676 = int_to_ptr.vmem [resolvable:$true] %s675
      %681 = dma.vmem_to_hbm [thread:$0]  %s676, 4096, %s5, [#allocation4], 256, 256, 16
    $region41: #{tpu_custom_call.1} parent=1 // pred_fallthru
      _
    // Predicated region
    $region42: #{tpu_custom_call.1} parent=1 // pred_check
      _
    $region43: #{tpu_custom_call.1} parent=1 // pred_check_branch
      %683 = sbr.rel (0) target = $region45
    $region44: #{tpu_custom_call.1} parent=1 // pred_region
      %s685 = ssub.s32 4096, 4096
      %686 = vsyncadd [#allocation10], %s685
      %s687 = sshll.u32 [#allocation9], 4
      %s688 = int_to_ptr.vmem [resolvable:$true] %s687
      %693 = dma.vmem_to_hbm [thread:$0]  %s688, 4096, %s6, [#allocation10], 256, 256, 16
    $region45: #{tpu_custom_call.1} parent=1 // pred_fallthru
      _
    // Predicated region
    $region46: #{tpu_custom_call.1} parent=1 // pred_check
      _
    $region47: #{tpu_custom_call.1} parent=1 // pred_check_branch
      %695 = sbr.rel (0) target = $region49
    $region48: #{tpu_custom_call.1} parent=1 // pred_region
      %696 = dma.done [#allocation4], 4096
    $region49: #{tpu_custom_call.1} parent=1 // pred_fallthru
      _
    // Predicated region
    $region50: #{tpu_custom_call.1} parent=1 // pred_check
      _
    $region51: #{tpu_custom_call.1} parent=1 // pred_check_branch
      %698 = sbr.rel (0) target = $region53
    $region52: #{tpu_custom_call.1} parent=1 // pred_region
      %699 = dma.done [#allocation10], 4096
    $region53: #{tpu_custom_call.1} parent=1 // pred_fallthru
      _
    %700 = vsyncpa [#allocation3], 1
    %701 = vsyncpa [#allocation6], 1
    %702 = vsyncpa [#allocation4], 1
    %703 = vsyncpa [#allocation10], 1

</llo_original>
